<compile_context>
chip_gen: v6e
topology: v6e:2x2x1
jax: 0.10.0
libtpu: 0.0.40
codegen_flags: <defaults>
</compile_context>

<pallas_src>
import math

import jax
import jax.numpy as jnp
from jax.experimental import pallas as pl
from jax.experimental.pallas import tpu as pltpu


def _round_up(x: int, m: int) -> int:
    return -(-x // m) * m


def _fused_proto_kernel(x_ref, w_ref, o_ref):
    # x_ref: (tm, D) activation tile, w_ref: (D, tn) fused pre-transposed
    # weight tile, o_ref: (tm, tn) output tile.  Cast x to the weight dtype
    # in-kernel (bf16 in the production path) and accumulate in f32 on the MXU.
    x = x_ref[...].astype(w_ref.dtype)
    o_ref[...] = jnp.dot(
        x, w_ref[...], preferred_element_type=jnp.float32
    ).astype(o_ref.dtype)


def fused_prototypes_matmul(x: jax.Array, w_t: jax.Array, *,
                            tm: int = 512, tn: int = 1024,
                            out_dtype=None) -> jax.Array:
    """Compute x @ w_t with a single Pallas kernel.

    x:   (B, D)           activations (any float dtype; f32 typical)
    w_t: (D, K_pad)       fused, pre-transposed prototype weights,
                          K_pad a multiple of 128 (lane-dense output)
    returns: (B, K_pad)   in out_dtype (defaults to x.dtype)
    """
    B, D = x.shape
    D2, Kp = w_t.shape
    assert D == D2, "feature dims must match"
    assert Kp % 128 == 0, "fused K must be padded to a multiple of 128"
    if out_dtype is None:
        out_dtype = x.dtype

    # Clamp tiles to the problem so block_shape never exceeds the array and
    # always satisfies the (8, 128) layout rule.
    tm = min(tm, _round_up(B, 8))
    tn = min(tn, Kp)
    assert tm % 8 == 0 and tn % 128 == 0

    n_b = pl.cdiv(B, tm)   # partial final batch block: output writes masked
    n_k = pl.cdiv(Kp, tn)

    cost = pl.CostEstimate(
        flops=2 * B * D * Kp,
        transcendentals=0,
        bytes_accessed=(B * D * x.dtype.itemsize
                        + D * Kp * w_t.dtype.itemsize
                        + B * Kp * jnp.dtype(out_dtype).itemsize),
    )

    return pl.pallas_call(
        _fused_proto_kernel,
        out_shape=jax.ShapeDtypeStruct((B, Kp), out_dtype),
        # K axis OUTER, batch axis INNER: the (D, tn) weight tile index is
        # constant across the inner batch steps, so each weight tile is
        # DMA'd from HBM exactly once; the tiny x tile re-reads are free.
        grid=(n_k, n_b),
        in_specs=[
            pl.BlockSpec((tm, D), lambda j, i: (i, 0)),   # activations
            pl.BlockSpec((D, tn), lambda j, i: (0, j)),   # fused weights
        ],
        out_specs=pl.BlockSpec((tm, tn), lambda j, i: (i, j)),
        compiler_params=pltpu.CompilerParams(
            dimension_semantics=("parallel", "parallel"),
        ),
        cost_estimate=cost,
    )(x, w_t)


class MultiPrototypes:
    """JAX/Pallas port of the PyTorch MultiPrototypes module.

    Forward semantics match the PyTorch module: returns a list of per-head
    projections [x @ W_i^T], one per entry of nmb_prototypes.
    """

    def __init__(self, output_dim: int, nmb_prototypes, key: jax.Array,
                 param_dtype=jnp.bfloat16):
        self.nmb_heads = len(nmb_prototypes)
        self.nmb_prototypes = list(nmb_prototypes)
        self.output_dim = output_dim

        # Deterministic init matching nn.Linear default:
        # U(-1/sqrt(in_features), 1/sqrt(in_features)), weight shape (K, D).
        bound = 1.0 / math.sqrt(output_dim)
        keys = jax.random.split(key, self.nmb_heads)
        self.weights = []
        for k_i, subkey in zip(self.nmb_prototypes, keys):
            w = jax.random.uniform(
                subkey, (k_i, output_dim), dtype=jnp.float32,
                minval=-bound, maxval=bound,
            )
            self.weights.append(w)

        # Fused, pre-transposed weight: each head's K_i is padded up to a
        # multiple of 128 BEFORE concatenation, so every head's band in the
        # fused output starts at a lane-aligned offset (cheap slices) and the
        # kernel output is lane-dense.  Stored in param_dtype (bf16 default).
        blocks, offsets, off = [], [], 0
        for w, k_i in zip(self.weights, self.nmb_prototypes):
            kp_i = _round_up(k_i, 128)
            wt = w.T  # (D, K_i)
            if kp_i > k_i:
                wt = jnp.pad(wt, ((0, 0), (0, kp_i - k_i)))
            blocks.append(wt)
            offsets.append(off)
            off += kp_i
        self.w_fused_t = jnp.concatenate(blocks, axis=1).astype(param_dtype)
        self._offsets = offsets
        self.k_pad = off  # total padded K

    def __call__(self, x: jax.Array, *, tm: int = 512, tn: int = 1024):
        # One kernel call for all heads; per-head outputs are lane-aligned
        # slices of the fused (B, K_pad) result.
        fused = fused_prototypes_matmul(
            x, self.w_fused_t, tm=tm, tn=tn, out_dtype=x.dtype
        )
        return [
            fused[:, off:off + k_i]
            for off, k_i in zip(self._offsets, self.nmb_prototypes)
        ]


def _reference(x, weights):
    return [x @ w.T for w in weights]


if __name__ == "__main__":
    key = jax.random.PRNGKey(0)
    k_init, k_x, k_x2 = jax.random.split(key, 3)

    batch = 8
    output_dim = 32
    nmb_prototypes = [16, 24, 8]

    # --- exact-numerics check: f32 params, small batch, single-tile grid ---
    model_f32 = MultiPrototypes(output_dim, nmb_prototypes, k_init,
                                param_dtype=jnp.float32)
    x = jax.random.normal(k_x, (batch, output_dim), dtype=jnp.float32)
    outs = [jax.block_until_ready(o) for o in model_f32(x)]
    refs = _reference(x, model_f32.weights)
    for o, r, k_i in zip(outs, refs, nmb_prototypes):
        assert o.shape == (batch, k_i), (o.shape, (batch, k_i))
        assert jnp.allclose(o, r, atol=1e-5, rtol=1e-5), \
            "mismatch vs reference (f32 params)"

    # --- production path: bf16 params, non-multiple batch, K + B tiling ---
    model = MultiPrototypes(output_dim, nmb_prototypes, k_init)  # bf16 params
    big_batch = 260
    x_big = jax.random.normal(k_x2, (big_batch, output_dim), dtype=jnp.float32)
    outs_big = [jax.block_until_ready(o) for o in model(x_big, tm=128, tn=128)]
    refs_big = _reference(x_big, model.weights)
    for o, r, k_i in zip(outs_big, refs_big, nmb_prototypes):
        assert o.shape == (big_batch, k_i)
        # bf16 operands / f32 accumulation: loose tolerance vs f32 reference.
        assert jnp.allclose(o, r, atol=5e-2, rtol=5e-2), \
            "mismatch vs reference (bf16 params, tiled B/K)"

    print("KERNEL_OK")
</pallas_src>

<mosaic_0001>
module attributes {stable_mosaic.version = 11 : i64} {
  func.func @_fused_proto_kernel(%arg0: i32, %arg1: i32, %arg2: memref<8x32xf32, #tpu.memory_space<vmem>>, %arg3: memref<32x384xf32, #tpu.memory_space<vmem>>, %arg4: memref<8x384xf32, #tpu.memory_space<vmem>>) attributes {dimension_semantics = [#tpu.dimension_semantics<parallel>, #tpu.dimension_semantics<parallel>], iteration_bounds = array<i64: 1, 1>, scalar_prefetch = 0 : i64, scratch_operands = 0 : i64, tpu.core_type = #tpu.core_type<tc>, window_params = [{transform_indices = @transform_0, window_bounds = array<i64: 8, 32>}, {transform_indices = @transform_1, window_bounds = array<i64: 32, 384>}, {transform_indices = @transform_2, window_bounds = array<i64: 8, 384>}]} {
    %c0 = arith.constant 0 : index
    %c0_0 = arith.constant 0 : index
    %0 = vector.load %arg2[%c0, %c0_0] : memref<8x32xf32, #tpu.memory_space<vmem>>, vector<8x32xf32>
    %c0_1 = arith.constant 0 : index
    %c0_2 = arith.constant 0 : index
    %1 = vector.load %arg3[%c0_1, %c0_2] : memref<32x384xf32, #tpu.memory_space<vmem>>, vector<32x384xf32>
    %cst = arith.constant dense<0.000000e+00> : vector<8x384xf32>
    %2 = tpu.matmul %0, %1, %cst {dimension_numbers = #tpu.dot_dimension_numbers<[1], [0], [0], [1], [0, 0, 1, 1], [], []>} : vector<8x32xf32>, vector<32x384xf32>, vector<8x384xf32> -> vector<8x384xf32>
    %c0_3 = arith.constant 0 : index
    %c0_4 = arith.constant 0 : index
    %3 = vector.load %arg4[%c0_3, %c0_4] : memref<8x384xf32, #tpu.memory_space<vmem>>, vector<8x384xf32>
    tpu.vector_store %arg4[%c0_3, %c0_4], %2 {strides = array<i32>} : memref<8x384xf32, #tpu.memory_space<vmem>>, vector<8x384xf32>,
    return
  }
  func.func @transform_0(%arg0: i32, %arg1: i32) -> (i32, i32) {
    %c0_i32 = arith.constant 0 : i32
    %c0_i32_0 = arith.constant 0 : i32
    return %arg1, %c0_i32 : i32, i32
  }
  func.func @transform_1(%arg0: i32, %arg1: i32) -> (i32, i32) {
    %c0_i32 = arith.constant 0 : i32
    %c0_i32_0 = arith.constant 0 : i32
    return %c0_i32, %arg0 : i32, i32
  }
  func.func @transform_2(%arg0: i32, %arg1: i32) -> (i32, i32) {
    %c0_i32 = arith.constant 0 : i32
    return %arg1, %arg0 : i32, i32
  }
}

</mosaic_0001>

<llo_original>
// kernel: tpu_custom_call.1
$region0: #{tpu_custom_call.1}
  #allocation0 [shape = 'u32[]', space=smem, size = 0x4, offset = 0x4, fixed_abs, tag = 'smem constant byte address 0x4 - core index']
  #allocation1 [shape = 'u32[144,128]{1,0:T(1,128)}', space=vmem, size = 0x12000, scoped, tag = 'internal scratch']
  %s0 = inlined_call_operand.hbm [shape: f32[8,32], index: 0, kind: input, shape index: {}]
  %s1 = inlined_call_operand.hbm [shape: f32[32,384], index: 1, kind: input, shape index: {}]
  %s2 = inlined_call_operand.hbm [shape: f32[8,384], index: 2, kind: output, shape index: {}]
  %s3 = sld [smem:[#allocation0]]
  $region26: #{tpu_custom_call.1} parent=0
    _
  %s5 = ssub.s32 1, %s3
  %s6 = scalar_select 0, %s5, %s3
  $region1: #{tpu_custom_call.1} parent=0
    #allocation2 [shape = 'u8[4096]{0}', space=vmem, size = 0x1000, scoped, tag = 'input window, operand 0, single buffered']
    #allocation3 [shape = 's32[1]{0}', space=sflag, size = 0x4, scoped, tag = 'scoped memory for tpu_custom_call.1']
    #allocation4 [shape = 's32[1]{0}', space=sflag, size = 0x4, scoped, tag = 'scoped memory for tpu_custom_call.1']
    #allocation5 [shape = 'u8[49152]{0}', space=vmem, size = 0xc000, scoped, tag = 'input window, operand 1, single buffered']
    #allocation6 [shape = 's32[1]{0}', space=sflag, size = 0x4, scoped, tag = 'scoped memory for tpu_custom_call.1']
    #allocation7 [shape = 'u8[12288]{0}', space=vmem, size = 0x3000, scoped, tag = 'output window, operand 0, single buffered']
    %7 = vsyncpa [#allocation3], 0
    %8 = vsyncpa [#allocation6], 0
    %9 = vsyncpa [#allocation4], 0
    // Predicated region
    $region2: #{tpu_custom_call.1} parent=1 // pred_check
      _
    $region3: #{tpu_custom_call.1} parent=1 // pred_check_branch
      %11 = sbr.rel (0) target = $region5
    $region4: #{tpu_custom_call.1} parent=1 // pred_region
      %s13 = ssub.s32 128, 128
      %14 = vsyncadd [#allocation3], %s13
      %s16 = sshll.u32 [#allocation2], 4
      %s17 = int_to_ptr.vmem [resolvable:$true] %s16
      %19 = dma.hbm_to_vmem [thread:$0]  %s0, 128, %s17, [#allocation3]
    $region5: #{tpu_custom_call.1} parent=1 // pred_fallthru
      _
    // Predicated region
    $region6: #{tpu_custom_call.1} parent=1 // pred_check
      _
    $region7: #{tpu_custom_call.1} parent=1 // pred_check_branch
      %21 = sbr.rel (0) target = $region9
    $region8: #{tpu_custom_call.1} parent=1 // pred_region
      %s23 = ssub.s32 1536, 1536
      %24 = vsyncadd [#allocation6], %s23
      %s25 = sshll.u32 [#allocation5], 4
      %s26 = int_to_ptr.vmem [resolvable:$true] %s25
      %31 = dma.hbm_to_vmem [thread:$0]  %s1, 1536, %s26, [#allocation6], 384, 384, 24
    $region9: #{tpu_custom_call.1} parent=1 // pred_fallthru
      _
    // Predicated region
    $region10: #{tpu_custom_call.1} parent=1 // pred_check
      _
    $region11: #{tpu_custom_call.1} parent=1 // pred_check_branch
      %33 = sbr.rel (0) target = $region13
    $region12: #{tpu_custom_call.1} parent=1 // pred_region
      %34 = dma.done [#allocation3], 128
    $region13: #{tpu_custom_call.1} parent=1 // pred_fallthru
      _
    // Predicated region
    $region14: #{tpu_custom_call.1} parent=1 // pred_check
      _
    $region15: #{tpu_custom_call.1} parent=1 // pred_check_branch
      %36 = sbr.rel (0) target = $region17
    $region16: #{tpu_custom_call.1} parent=1 // pred_region
      %37 = dma.done [#allocation6], 1536
    $region17: #{tpu_custom_call.1} parent=1 // pred_fallthru
      _
    %v38 = vld [vmem:[#allocation2] sm:$0xff]
    %v39 = vld [vmem:[#allocation5] sm:$0xff]
    %v40 = vld [vmem:[#allocation5 + $0x8] sm:$0xff]
    %v41 = vld [vmem:[#allocation5 + $0x10] sm:$0xff]
    %v42 = vld [vmem:[#allocation5 + $0x18] sm:$0xff]
    %v43 = vld [vmem:[#allocation5 + $0x20] sm:$0xff]
    %v44 = vld [vmem:[#allocation5 + $0x28] sm:$0xff]
    %v45 = vld [vmem:[#allocation5 + $0x30] sm:$0xff]
    %v46 = vld [vmem:[#allocation5 + $0x38] sm:$0xff]
    %v47 = vld [vmem:[#allocation5 + $0x40] sm:$0xff]
    %v48 = vld [vmem:[#allocation5 + $0x48] sm:$0xff]
    %v49 = vld [vmem:[#allocation5 + $0x50] sm:$0xff]
    %v50 = vld [vmem:[#allocation5 + $0x58] sm:$0xff]
    %vm51 = vcmask 261120
    %v53 = vsel %vm51, %v38, 0
    %55 = vmatprep.subr.mxu0 0.0
    %56 = vmatpush1.msra.mxu0 0.0
    %57 = vmatprep.subr.mxu0 0.0
    %58 = vmatpush1.msra.mxu0 0.0
    %59 = vmatprep.subr.mxu0 0.0
    %60 = vmatpush1.msra.mxu0 0.0
    %61 = vmatprep.subr.mxu0 0.0
    %62 = vmatpush1.msra.mxu0 0.0
    %63 = vmatprep.subr.mxu0 0.0
    %64 = vmatpush1.msra.mxu0 0.0
    %65 = vmatprep.subr.mxu0 0.0
    %66 = vmatpush1.msra.mxu0 0.0
    %67 = vmatprep.subr.mxu0 0.0
    %68 = vmatpush1.msra.mxu0 0.0
    %69 = vmatprep.subr.mxu0 0.0
    %70 = vmatpush1.msra.mxu0 0.0
    %71 = vmatprep.subr.mxu0 0.0
    %72 = vmatpush1.msra.mxu0 0.0
    %73 = vmatprep.subr.mxu0 0.0
    %74 = vmatpush1.msra.mxu0 0.0
    %75 = vmatprep.subr.mxu0 0.0
    %76 = vmatpush1.msra.mxu0 0.0
    %77 = vmatprep.subr.mxu0 0.0
    %78 = vmatpush1.msra.mxu0 0.0
    %79 = vmatprep.subr.mxu0 %v49
    %80 = vmatpush1.msra.mxu0 %v48
    %81 = vmatprep.subr.mxu0 %v46
    %82 = vmatpush1.msra.mxu0 %v45
    %83 = vmatprep.subr.mxu0 %v43
    %84 = vmatpush1.msra.mxu0 %v42
    %85 = vmatprep.subr.mxu0 %v40
    %86 = vmatpush1.msra.mxu0 %v39
    %87 = vmatprep.subr.mxu0 0.0
    %88 = vmatpush2.msra.mxu0 0.0
    %89 = vmatprep.subr.mxu0 0.0
    %90 = vmatpush2.msra.mxu0 0.0
    %91 = vmatprep.subr.mxu0 0.0
    %92 = vmatpush2.msra.mxu0 0.0
    %93 = vmatprep.subr.mxu0 0.0
    %94 = vmatpush2.msra.mxu0 0.0
    %95 = vmatprep.subr.mxu0 0.0
    %96 = vmatpush2.msra.mxu0 0.0
    %97 = vmatprep.subr.mxu0 0.0
    %98 = vmatpush2.msra.mxu0 0.0
    %99 = vmatprep.subr.mxu0 0.0
    %100 = vmatpush2.msra.mxu0 0.0
    %101 = vmatprep.subr.mxu0 0.0
    %102 = vmatpush2.msra.mxu0 0.0
    %103 = vmatprep.subr.mxu0 0.0
    %104 = vmatpush2.msra.mxu0 0.0
    %105 = vmatprep.subr.mxu0 0.0
    %106 = vmatpush2.msra.mxu0 0.0
    %107 = vmatprep.subr.mxu0 0.0
    %108 = vmatpush2.msra.mxu0 0.0
    %109 = vmatprep.subr.mxu0 0.0
    %110 = vmatpush2.msra.mxu0 0.0
    %111 = vmatprep.subr.mxu0 0.0
    %112 = vmatpush2.msra.mxu0 0.0
    %113 = vmatprep.subr.mxu0 0.0
    %114 = vmatpush2.msra.mxu0 0.0
    %115 = vmatprep.subr.mxu0 0.0
    %116 = vmatpush2.msra.mxu0 0.0
    %117 = vmatprep.subr.mxu0 0.0
    %118 = vmatpush2.msra.mxu0 0.0
    %119 = vmatprep.mubr.f32.mxu0 0.0
    %120 = vmatmul.mubr.f32.gmra.mxu0 %v53
    %v121 = vpop.f32.mrf.mxu0
    %v122 = vadd.f32 0.0, %v121
    %v123 = vpop.f32.mrf.mxu0
    %v124 = vadd.f32 0.0, %v123
    %125 = vdwg.mxu0
    %126 = vmatprep.subr.mxu0 0.0
    %127 = vmatpush1.msra.mxu0 0.0
    %128 = vmatprep.subr.mxu0 0.0
    %129 = vmatpush1.msra.mxu0 0.0
    %130 = vmatprep.subr.mxu0 0.0
    %131 = vmatpush1.msra.mxu0 0.0
    %132 = vmatprep.subr.mxu0 0.0
    %133 = vmatpush1.msra.mxu0 0.0
    %134 = vmatprep.subr.mxu0 0.0
    %135 = vmatpush1.msra.mxu0 0.0
    %136 = vmatprep.subr.mxu0 0.0
    %137 = vmatpush1.msra.mxu0 0.0
    %138 = vmatprep.subr.mxu0 0.0
    %139 = vmatpush1.msra.mxu0 0.0
    %140 = vmatprep.subr.mxu0 0.0
    %141 = vmatpush1.msra.mxu0 0.0
    %142 = vmatprep.subr.mxu0 0.0
    %143 = vmatpush1.msra.mxu0 0.0
    %144 = vmatprep.subr.mxu0 0.0
    %145 = vmatpush1.msra.mxu0 0.0
    %146 = vmatprep.subr.mxu0 0.0
    %147 = vmatpush1.msra.mxu0 0.0
    %148 = vmatprep.subr.mxu0 0.0
    %149 = vmatpush1.msra.mxu0 0.0
    %150 = vmatprep.subr.mxu0 0.0
    %151 = vmatpush1.msra.mxu0 %v50
    %152 = vmatprep.subr.mxu0 0.0
    %153 = vmatpush1.msra.mxu0 %v47
    %154 = vmatprep.subr.mxu0 0.0
    %155 = vmatpush1.msra.mxu0 %v44
    %156 = vmatprep.subr.mxu0 0.0
    %157 = vmatpush1.msra.mxu0 %v41
    %158 = vmatprep.subr.mxu0 0.0
    %159 = vmatpush2.msra.mxu0 0.0
    %160 = vmatprep.subr.mxu0 0.0
    %161 = vmatpush2.msra.mxu0 0.0
    %162 = vmatprep.subr.mxu0 0.0
    %163 = vmatpush2.msra.mxu0 0.0
    %164 = vmatprep.subr.mxu0 0.0
    %165 = vmatpush2.msra.mxu0 0.0
    %166 = vmatprep.subr.mxu0 0.0
    %167 = vmatpush2.msra.mxu0 0.0
    %168 = vmatprep.subr.mxu0 0.0
    %169 = vmatpush2.msra.mxu0 0.0
    %170 = vmatprep.subr.mxu0 0.0
    %171 = vmatpush2.msra.mxu0 0.0
    %172 = vmatprep.subr.mxu0 0.0
    %173 = vmatpush2.msra.mxu0 0.0
    %174 = vmatprep.subr.mxu0 0.0
    %175 = vmatpush2.msra.mxu0 0.0
    %176 = vmatprep.subr.mxu0 0.0
    %177 = vmatpush2.msra.mxu0 0.0
    %178 = vmatprep.subr.mxu0 0.0
    %179 = vmatpush2.msra.mxu0 0.0
    %180 = vmatprep.subr.mxu0 0.0
    %181 = vmatpush2.msra.mxu0 0.0
    %182 = vmatprep.subr.mxu0 0.0
    %183 = vmatpush2.msra.mxu0 0.0
    %184 = vmatprep.subr.mxu0 0.0
    %185 = vmatpush2.msra.mxu0 0.0
    %186 = vmatprep.subr.mxu0 0.0
    %187 = vmatpush2.msra.mxu0 0.0
    %188 = vmatprep.subr.mxu0 0.0
    %189 = vmatpush2.msra.mxu0 0.0
    %190 = vmatprep.mubr.f32.mxu0 0.0
    %191 = vmatmul.mubr.f32.gmra.mxu0 %v53
    %v192 = vpop.f32.mrf.mxu0
    %v193 = vadd.f32 0.0, %v192
    %v194 = vpop.f32.mrf.mxu0
    %195 = vdwg.mxu0
    %196 = vst [vmem:[#allocation7] sm:$0xff] %v122
    %197 = vst [vmem:[#allocation7 + $0x8] sm:$0xff] %v124
    %198 = vst [vmem:[#allocation7 + $0x10] sm:$0xff] %v193
    // Predicated region
    $region18: #{tpu_custom_call.1} parent=1 // pred_check
      _
    $region19: #{tpu_custom_call.1} parent=1 // pred_check_branch
      %200 = sbr.rel (0) target = $region21
    $region20: #{tpu_custom_call.1} parent=1 // pred_region
      %s202 = ssub.s32 384, 384
      %203 = vsyncadd [#allocation4], %s202
      %s205 = sshll.u32 [#allocation7], 4
      %s206 = int_to_ptr.vmem [resolvable:$true] %s205
      %208 = dma.vmem_to_hbm [thread:$0]  %s206, 384, %s2, [#allocation4]
    $region21: #{tpu_custom_call.1} parent=1 // pred_fallthru
      _
    // Predicated region
    $region22: #{tpu_custom_call.1} parent=1 // pred_check
      _
    $region23: #{tpu_custom_call.1} parent=1 // pred_check_branch
      %210 = sbr.rel (0) target = $region25
    $region24: #{tpu_custom_call.1} parent=1 // pred_region
      %211 = dma.done [#allocation4], 384
    $region25: #{tpu_custom_call.1} parent=1 // pred_fallthru
      _
    %212 = vsyncpa [#allocation3], 1
    %213 = vsyncpa [#allocation6], 1
    %214 = vsyncpa [#allocation4], 1

</llo_original>
